<compile_context>
chip_gen: v5e
topology: v5e:2x2
jax: 0.10.0
libtpu: 0.0.40
codegen_flags: <defaults>
</compile_context>

<pallas_src>
import functools

import jax
import jax.numpy as jnp
from jax import lax
from jax.experimental import pallas as pl
from jax.experimental.pallas import tpu as pltpu


_MIB = 1024 * 1024
_INV_SQRT2 = 0.7071067811865476


def _round_up(x, m):
    return ((x + m - 1) // m) * m


def _sublane(dtype):
    # 8 for f32, 16 for bf16, 32 for int8 -> keeps tiles sublane-aligned.
    return max(8, 32 // jnp.dtype(dtype).itemsize)


def _vmem_budget_bytes():
    """Per-generation VMEM budget with headroom for Mosaic internal scratch.

    ~85% of physical capacity: ~108 MiB on v5e/v6e (128 MiB VMEM), ~56 MiB on
    v7x (64 MiB VMEM).  Falls back to the v7x floor if the query fails.
    """
    try:
        cap = int(pltpu.get_tpu_info().vmem_capacity_bytes)
    except Exception:  # robustness across JAX versions / host tracing
        cap = 64 * _MIB
    return min(int(cap * 0.85), 110 * _MIB)


def _gelu_exact(h):
    # exact erf GELU (matches nn.GELU() default), computed in f32.
    return 0.5 * h * (1.0 + lax.erf(h * jnp.float32(_INV_SQRT2)))


def _ffn_kernel_resident(x_ref, w1_ref, b1_ref, w2_ref, b2_ref, o_ref):
    # Weights are full blocks with constant index_maps -> DMA'd once.
    h = jnp.dot(x_ref[...], w1_ref[...], preferred_element_type=jnp.float32)
    h = _gelu_exact(h + b1_ref[...].astype(jnp.float32))
    out = jnp.dot(h.astype(w2_ref.dtype), w2_ref[...],
                  preferred_element_type=jnp.float32)
    o_ref[...] = (out + b2_ref[...].astype(jnp.float32)).astype(o_ref.dtype)


def _ffn_kernel_tiled(x_ref, w1_ref, b1_ref, w2_ref, b2_ref, o_ref, acc_ref):
    # d_ff is tiled on an inner "arbitrary" grid axis; acc_ref is a resident
    # (tm, d_model) f32 accumulator seeded with b2 at ff==0.
    ff = pl.program_id(1)

    h = jnp.dot(x_ref[...], w1_ref[...], preferred_element_type=jnp.float32)
    h = _gelu_exact(h + b1_ref[...].astype(jnp.float32))
    part = jnp.dot(h.astype(w2_ref.dtype), w2_ref[...],
                   preferred_element_type=jnp.float32)

    @pl.when(ff == 0)
    def _():
        acc_ref[...] = part + b2_ref[...].astype(jnp.float32)

    @pl.when(ff != 0)
    def _():
        acc_ref[...] += part

    @pl.when(ff == pl.num_programs(1) - 1)
    def _():
        o_ref[...] = acc_ref[...].astype(o_ref.dtype)


@functools.partial(
    jax.jit, static_argnames=("tm", "ff_tile", "compute_dtype", "force_tiled"))
def ffn_pallas(x, w1, b1, w2, b2, *, tm=1024, ff_tile=1024,
               compute_dtype=None, force_tiled=False):
    """x: (batch, seq, d_model) -> (batch, seq, d_model).

    w1: (d_model, d_ff), b1: (d_ff,), w2: (d_ff, d_model), b2: (d_model,)
    (weights stored pre-transposed vs. the PyTorch nn.Linear .weight layout).
    compute_dtype: optional (e.g. jnp.bfloat16) low-precision operand path;
    biases, GELU and accumulation stay in f32.
    """
    batch, seq, d_model = x.shape
    d_ff = w1.shape[1]
    tokens = batch * seq
    out_dtype = x.dtype

    if compute_dtype is not None:
        x = x.astype(compute_dtype)
        w1 = w1.astype(compute_dtype)
        w2 = w2.astype(compute_dtype)

    itm = jnp.dtype(x.dtype).itemsize
    itw = jnp.dtype(w1.dtype).itemsize
    sub = _sublane(x.dtype)
    budget = _vmem_budget_bytes()

    # ---- lane-dense padding targets -----------------------------------------
    d_model_p = _round_up(d_model, 128)
    d_ff_128 = _round_up(d_ff, 128)

    # ---- token tile ceiling that keeps >=2 tiles (feeds both v7x TCs) -------
    tm_two = _round_up((tokens + 1) // 2, sub) if tokens > sub else sub

    # ---- path selection: resident weights vs ff-tiled ------------------------
    # Weights (+ 8-sublane-padded bias blocks) if kept fully resident:
    weight_bytes = 2 * d_model_p * d_ff_128 * itw + 8 * (d_ff_128 + d_model_p) * itw
    # Per-token-row VMEM: x + out double-buffered, single f32 hidden temp.
    per_row_bytes = 4 * d_model_p * itm + 4 * d_ff_128
    resident = (not force_tiled
                and weight_bytes <= budget // 3
                and weight_bytes + sub * per_row_bytes <= budget)

    if resident:
        tm_budget = (budget - weight_bytes) // per_row_bytes
        tm_budget = max(sub, (tm_budget // sub) * sub)
        tm_eff = max(sub, min(tm, tm_two, tm_budget))
        tm_eff = (tm_eff // sub) * sub
        ff_tile_eff = d_ff_128
        d_ff_p = d_ff_128
    else:
        tm_eff = max(sub, min(tm, tm_two))
        tm_eff = (tm_eff // sub) * sub
        ff_tile_eff = min(_round_up(ff_tile, 128), d_ff_128)

        def est(tm_, ff_):
            return (4 * tm_ * d_model_p * itm        # x + out tiles (dbl-buf)
                    + 4 * d_model_p * ff_ * itw      # w1 + w2 tiles (dbl-buf)
                    + 16 * (ff_ + d_model_p) * itw   # bias blocks (8-sublane pad)
                    + tm_ * d_model_p * 4            # f32 accumulator scratch
                    + tm_ * ff_ * 4)                 # f32 hidden temp (single)

        # Shrink ff_tile first (256 still fills the MXU), then tm.
        while est(tm_eff, ff_tile_eff) > budget and ff_tile_eff > 256:
            ff_tile_eff = max(256, ((ff_tile_eff // 2) // 128) * 128)
        while est(tm_eff, ff_tile_eff) > budget and tm_eff > sub:
            tm_eff = max(sub, ((tm_eff // 2) // sub) * sub)
        d_ff_p = _round_up(d_ff, ff_tile_eff)

    tokens_p = _round_up(tokens, tm_eff)
    pad_tok = tokens_p - tokens
    pad_dm = d_model_p - d_model
    pad_ff = d_ff_p - d_ff

    # ---- zero padding (exact: padded rows/cols contribute nothing) ----------
    x2d = x.reshape(tokens, d_model)
    if pad_tok or pad_dm:
        x2d = jnp.pad(x2d, ((0, pad_tok), (0, pad_dm)))
    if pad_dm or pad_ff:
        w1 = jnp.pad(w1, ((0, pad_dm), (0, pad_ff)))
        w2 = jnp.pad(w2, ((0, pad_ff), (0, pad_dm)))
    if pad_ff:
        b1 = jnp.pad(b1, ((0, pad_ff),))
    if pad_dm:
        b2 = jnp.pad(b2, ((0, pad_dm),))
    b1_2d = b1.reshape(1, d_ff_p)
    b2_2d = b2.reshape(1, d_model_p)

    n_tok_tiles = tokens_p // tm_eff
    weight_streams = 1 if resident else n_tok_tiles
    cost = pl.CostEstimate(
        flops=4 * tokens_p * d_model_p * d_ff_p,
        transcendentals=tokens_p * d_ff_p,
        bytes_accessed=int(2 * tokens_p * d_model_p * itm
                           + weight_streams * 2 * d_model_p * d_ff_p * itw),
    )
    cparams_kwargs = dict(vmem_limit_bytes=int(budget))

    if resident:
        out2d = pl.pallas_call(
            _ffn_kernel_resident,
            out_shape=jax.ShapeDtypeStruct((tokens_p, d_model_p), out_dtype),
            grid_spec=pltpu.PrefetchScalarGridSpec(
                num_scalar_prefetch=0,
                grid=(n_tok_tiles,),
                in_specs=[
                    pl.BlockSpec((tm_eff, d_model_p), lambda i: (i, 0)),   # x
                    pl.BlockSpec((d_model_p, d_ff_p), lambda i: (0, 0)),   # W1
                    pl.BlockSpec((1, d_ff_p), lambda i: (0, 0)),           # b1
                    pl.BlockSpec((d_ff_p, d_model_p), lambda i: (0, 0)),   # W2
                    pl.BlockSpec((1, d_model_p), lambda i: (0, 0)),        # b2
                ],
                out_specs=pl.BlockSpec((tm_eff, d_model_p), lambda i: (i, 0)),
            ),
            compiler_params=pltpu.CompilerParams(
                dimension_semantics=("parallel",), **cparams_kwargs),
            cost_estimate=cost,
        )(x2d, w1, b1_2d, w2, b2_2d)
    else:
        out2d = pl.pallas_call(
            _ffn_kernel_tiled,
            out_shape=jax.ShapeDtypeStruct((tokens_p, d_model_p), out_dtype),
            grid_spec=pltpu.PrefetchScalarGridSpec(
                num_scalar_prefetch=0,
                grid=(n_tok_tiles, d_ff_p // ff_tile_eff),
                in_specs=[
                    pl.BlockSpec((tm_eff, d_model_p), lambda i, j: (i, 0)),     # x
                    pl.BlockSpec((d_model_p, ff_tile_eff), lambda i, j: (0, j)),  # W1
                    pl.BlockSpec((1, ff_tile_eff), lambda i, j: (0, j)),         # b1
                    pl.BlockSpec((ff_tile_eff, d_model_p), lambda i, j: (j, 0)),  # W2
                    pl.BlockSpec((1, d_model_p), lambda i, j: (0, 0)),           # b2
                ],
                out_specs=pl.BlockSpec((tm_eff, d_model_p), lambda i, j: (i, 0)),
                scratch_shapes=[pltpu.VMEM((tm_eff, d_model_p), jnp.float32)],
            ),
            compiler_params=pltpu.CompilerParams(
                dimension_semantics=("parallel", "arbitrary"), **cparams_kwargs),
            cost_estimate=cost,
        )(x2d, w1, b1_2d, w2, b2_2d)

    return out2d[:tokens, :d_model].reshape(batch, seq, d_model)


def ffn_reference(x, w1, b1, w2, b2):
    h = jnp.dot(x, w1) + b1
    h = jax.nn.gelu(h, approximate=False)
    return jnp.dot(h, w2) + b2


if __name__ == "__main__":
    # Small, TPU-friendly shapes consistent with the module's forward:
    # inputs (batch, seq, d_model); d_ff is the hidden FFN width.
    batch, seq, d_model, d_ff = 2, 8, 128, 256

    key = jax.random.PRNGKey(0)
    kx, kw1, kb1, kw2, kb2 = jax.random.split(key, 5)

    x = jax.random.normal(kx, (batch, seq, d_model), dtype=jnp.float32)

    # Deterministic parameter init mirroring the module's __init__:
    #   weights ~ N(0, 0.02); biases ~ U(-1/sqrt(fan_in), 1/sqrt(fan_in))
    # Stored pre-transposed: w1 (d_model, d_ff), w2 (d_ff, d_model).
    w1 = 0.02 * jax.random.normal(kw1, (d_model, d_ff), dtype=jnp.float32)
    b1 = jax.random.uniform(kb1, (d_ff,), dtype=jnp.float32,
                            minval=-1.0 / jnp.sqrt(d_model),
                            maxval=1.0 / jnp.sqrt(d_model))
    w2 = 0.02 * jax.random.normal(kw2, (d_ff, d_model), dtype=jnp.float32)
    b2 = jax.random.uniform(kb2, (d_model,), dtype=jnp.float32,
                            minval=-1.0 / jnp.sqrt(d_ff),
                            maxval=1.0 / jnp.sqrt(d_ff))

    ref = ffn_reference(x, w1, b1, w2, b2)

    # Weight-resident path (chosen automatically for these small shapes).
    out = jax.block_until_ready(ffn_pallas(x, w1, b1, w2, b2))
    assert out.shape == (batch, seq, d_model)
    assert jnp.allclose(out, ref, atol=1e-5, rtol=1e-5), "resident path mismatch"

    # ff-tiled fallback path (forced), exercising the d_ff reduction axis.
    out_t = jax.block_until_ready(
        ffn_pallas(x, w1, b1, w2, b2, ff_tile=128, force_tiled=True))
    assert jnp.allclose(out_t, ref, atol=1e-5, rtol=1e-5), "tiled path mismatch"

    print("KERNEL_OK")
</pallas_src>

<mosaic_0001>
module attributes {stable_mosaic.version = 11 : i64} {
  func.func @_ffn_kernel_resident(%arg0: i32, %arg1: memref<8x128xf32, #tpu.memory_space<vmem>>, %arg2: memref<128x256xf32, #tpu.memory_space<vmem>>, %arg3: memref<1x256xf32, #tpu.memory_space<vmem>>, %arg4: memref<256x128xf32, #tpu.memory_space<vmem>>, %arg5: memref<1x128xf32, #tpu.memory_space<vmem>>, %arg6: memref<8x128xf32, #tpu.memory_space<vmem>>) attributes {dimension_semantics = [#tpu.dimension_semantics<parallel>], iteration_bounds = array<i64: 2>, scalar_prefetch = 0 : i64, scratch_operands = 0 : i64, tpu.core_type = #tpu.core_type<tc>, window_params = [{transform_indices = @transform_0, window_bounds = array<i64: 8, 128>}, {pipeline_mode = #tpu.pipeline_mode<synchronous>, transform_indices = @transform_1, window_bounds = array<i64: 128, 256>}, {pipeline_mode = #tpu.pipeline_mode<synchronous>, transform_indices = @transform_2, window_bounds = array<i64: 1, 256>}, {pipeline_mode = #tpu.pipeline_mode<synchronous>, transform_indices = @transform_3, window_bounds = array<i64: 256, 128>}, {pipeline_mode = #tpu.pipeline_mode<synchronous>, transform_indices = @transform_4, window_bounds = array<i64: 1, 128>}, {transform_indices = @transform_5, window_bounds = array<i64: 8, 128>}]} {
    %c0 = arith.constant 0 : index
    %c0_0 = arith.constant 0 : index
    %0 = vector.load %arg1[%c0, %c0_0] : memref<8x128xf32, #tpu.memory_space<vmem>>, vector<8x128xf32>
    %c0_1 = arith.constant 0 : index
    %c0_2 = arith.constant 0 : index
    %1 = vector.load %arg2[%c0_1, %c0_2] : memref<128x256xf32, #tpu.memory_space<vmem>>, vector<128x256xf32>
    %cst = arith.constant dense<0.000000e+00> : vector<8x256xf32>
    %2 = tpu.matmul %0, %1, %cst {dimension_numbers = #tpu.dot_dimension_numbers<[1], [0], [0], [1], [0, 0, 1, 1], [], []>} : vector<8x128xf32>, vector<128x256xf32>, vector<8x256xf32> -> vector<8x256xf32>
    %c0_3 = arith.constant 0 : index
    %c0_4 = arith.constant 0 : index
    %3 = vector.load %arg3[%c0_3, %c0_4] : memref<1x256xf32, #tpu.memory_space<vmem>>, vector<1x256xf32>
    %4 = vector.broadcast %3 : vector<1x256xf32> to vector<8x256xf32>
    %5 = arith.addf %2, %4 : vector<8x256xf32>
    %cst_5 = arith.constant 5.000000e-01 : f32
    %6 = vector.broadcast %cst_5 : f32 to vector<8x256xf32>
    %7 = arith.mulf %6, %5 : vector<8x256xf32>
    %cst_6 = arith.constant 0.707106769 : f32
    %8 = vector.broadcast %cst_6 : f32 to vector<8x256xf32>
    %9 = arith.mulf %5, %8 : vector<8x256xf32>
    %10 = math.erf %9 : vector<8x256xf32>
    %cst_7 = arith.constant 1.000000e+00 : f32
    %11 = vector.broadcast %cst_7 : f32 to vector<8x256xf32>
    %12 = arith.addf %11, %10 : vector<8x256xf32>
    %13 = arith.mulf %7, %12 : vector<8x256xf32>
    %c0_8 = arith.constant 0 : index
    %c0_9 = arith.constant 0 : index
    %14 = vector.load %arg4[%c0_8, %c0_9] : memref<256x128xf32, #tpu.memory_space<vmem>>, vector<256x128xf32>
    %cst_10 = arith.constant dense<0.000000e+00> : vector<8x128xf32>
    %15 = tpu.matmul %13, %14, %cst_10 {dimension_numbers = #tpu.dot_dimension_numbers<[1], [0], [0], [1], [0, 0, 1, 1], [], []>} : vector<8x256xf32>, vector<256x128xf32>, vector<8x128xf32> -> vector<8x128xf32>
    %c0_11 = arith.constant 0 : index
    %c0_12 = arith.constant 0 : index
    %16 = vector.load %arg5[%c0_11, %c0_12] : memref<1x128xf32, #tpu.memory_space<vmem>>, vector<1x128xf32>
    %17 = vector.broadcast %16 : vector<1x128xf32> to vector<8x128xf32>
    %18 = arith.addf %15, %17 : vector<8x128xf32>
    %c0_13 = arith.constant 0 : index
    %c0_14 = arith.constant 0 : index
    %19 = vector.load %arg6[%c0_13, %c0_14] : memref<8x128xf32, #tpu.memory_space<vmem>>, vector<8x128xf32>
    tpu.vector_store %arg6[%c0_13, %c0_14], %18 {strides = array<i32>} : memref<8x128xf32, #tpu.memory_space<vmem>>, vector<8x128xf32>,
    return
  }
  func.func @transform_0(%arg0: i32) -> (i32, i32) {
    %c0_i32 = arith.constant 0 : i32
    %c0_i32_0 = arith.constant 0 : i32
    return %arg0, %c0_i32 : i32, i32
  }
  func.func @transform_1(%arg0: i32) -> (i32, i32) {
    %c0_i32 = arith.constant 0 : i32
    %c0_i32_0 = arith.constant 0 : i32
    %c0_i32_1 = arith.constant 0 : i32
    return %c0_i32, %c0_i32_0 : i32, i32
  }
  func.func @transform_2(%arg0: i32) -> (i32, i32) {
    %c0_i32 = arith.constant 0 : i32
    %c0_i32_0 = arith.constant 0 : i32
    %c0_i32_1 = arith.constant 0 : i32
    return %c0_i32, %c0_i32_0 : i32, i32
  }
  func.func @transform_3(%arg0: i32) -> (i32, i32) {
    %c0_i32 = arith.constant 0 : i32
    %c0_i32_0 = arith.constant 0 : i32
    %c0_i32_1 = arith.constant 0 : i32
    return %c0_i32, %c0_i32_0 : i32, i32
  }
  func.func @transform_4(%arg0: i32) -> (i32, i32) {
    %c0_i32 = arith.constant 0 : i32
    %c0_i32_0 = arith.constant 0 : i32
    %c0_i32_1 = arith.constant 0 : i32
    return %c0_i32, %c0_i32_0 : i32, i32
  }
  func.func @transform_5(%arg0: i32) -> (i32, i32) {
    %c0_i32 = arith.constant 0 : i32
    %c0_i32_0 = arith.constant 0 : i32
    return %arg0, %c0_i32 : i32, i32
  }
}

</mosaic_0001>

<llo_original>
// kernel: ffn_pallas.1
$region0: #{ffn_pallas.1}
  #allocation0 [shape = 'u32[]', space=smem, size = 0x4, offset = 0x4, fixed_abs, tag = 'smem constant byte address 0x4 - core index']
  #allocation1 [shape = 'u32[72,128]{1,0:T(1,128)}', space=vmem, size = 0x9000, scoped, tag = 'internal scratch']
  %s0 = inlined_call_operand.hbm [shape: f32[16,128], index: 0, kind: input, shape index: {}]
  %s1 = inlined_call_operand.hbm [shape: f32[128,256], index: 1, kind: input, shape index: {}]
  %s2 = inlined_call_operand.vmem [shape: f32[1,256], index: 2, kind: input, shape index: {}]
  %s3 = inlined_call_operand.hbm [shape: f32[256,128], index: 3, kind: input, shape index: {}]
  %s4 = inlined_call_operand.vmem [shape: f32[1,128], index: 4, kind: input, shape index: {}]
  %s5 = inlined_call_operand.hbm [shape: f32[16,128], index: 5, kind: output, shape index: {}]
  %s6 = sld [smem:[#allocation0]]
  $region65: #{ffn_pallas.1} parent=0
    _
  %s8 = ssub.s32 1, %s6
  %s9 = scalar_select 0, %s8, %s6
  $region1: #{ffn_pallas.1} parent=0
    #allocation2 [shape = 'u8[8192]{0}', space=vmem, size = 0x2000, scoped, tag = 'input window, operand 0']
    #allocation3 [shape = 's32[2]{0}', space=sflag, size = 0x8, scoped, tag = 'scoped memory for ffn_pallas.1']
    #allocation4 [shape = 's32[2]{0}', space=sflag, size = 0x8, scoped, tag = 'scoped memory for ffn_pallas.1']
    #allocation5 [shape = 'u8[131072]{0}', space=vmem, size = 0x20000, scoped, tag = 'input window, operand 1, single buffered']
    #allocation6 [shape = 's32[1]{0}', space=sflag, size = 0x4, scoped, tag = 'scoped memory for ffn_pallas.1']
    #allocation7 [shape = 'u8[131072]{0}', space=vmem, size = 0x20000, scoped, tag = 'input window, operand 3, single buffered']
    #allocation8 [shape = 'u8[8192]{0}', space=vmem, size = 0x2000, scoped, tag = 'output window, operand 0']
    %10 = vsyncpa [#allocation3], 0
    %s11 = scalar_lea.sflag [#allocation3], 1
    %12 = vsyncpa %s11, 0
    %13 = vsyncpa [#allocation6], 0
    %14 = vsyncpa [#allocation4], 0
    %s15 = scalar_lea.sflag [#allocation4], 1
    %16 = vsyncpa %s15, 0
    loop: start=0, step=1, limit=4
    $region2: #{ffn_pallas.1} parent=1 // loop_pre_header
      _
    $region3: #{ffn_pallas.1} parent=1 // loop_header
      %s18 = sphi 0, %s22
      %p19 = scmp.ge.s32.totalorder %s18, 4
      %s28 = sphi 0, %s30
      %s31 = sphi 0, %s28
      %s32 = sphi 0, %s31
      %s48 = sphi 0, %s32
      %s52 = sphi 0, %s52
      %s54 = sphi 0, %s52
      %s55 = sphi 0, %s54
      %s69 = sphi 0, %s55
      %s73 = sphi 0, %s73
      %s75 = sphi 0, %s73
      %s76 = sphi 0, %s75
      %s90 = sphi 0, %s76
      %s94 = sphi 0, %s94
      %s96 = sphi 0, %s94
      %s97 = sphi 0, %s96
      %s111 = sphi 0, %s97
      %s115 = sphi 0, %s115
      %s117 = sphi 0, %s115
      %s118 = sphi 0, %s117
      %s132 = sphi 0, %s118
      %s138 = sphi 0, %s140
      %s141 = sphi 0, %s138
      %s142 = sphi 0, %s141
      %s158 = sphi 0, %s142
    $region4: #{ffn_pallas.1} parent=1 // loop_header_branch
      %21 = sbr.rel (%p19) target = $region8
    $region5: #{ffn_pallas.1} parent=1 // loop_body
      %s23 = ssub.s32 %s18, 1
      %s24 = ssub.s32 %s18, 2
      %s25 = sadd.s32 %s18, 1
      %s26 = ssub.s32 %s18, %s25
      %p27 = scmp.eq.s32.totalorder %s26, 0
      %s29 = sadd.s32 %s28, 1
      %s30 = scalar_select %p27, %s28, %s29
      %p33 = pneg %p27
      %p34 = scmp.eq.s32.totalorder %s18, 1
      %p35 = por %p33, %p34
      %p36 = scmp.ne.s32.totalorder %s28, %s31
      %p37 = scmp.eq.s32.totalorder %s18, 0
      %p38 = por %p36, %p37
      %p39 = scmp.ne.s32.totalorder %s28, %s31
      %p40 = scmp.eq.s32.totalorder %s23, 1
      %p41 = por %p39, %p40
      %p42 = scmp.ne.s32.totalorder %s31, %s32
      %p43 = scmp.eq.s32.totalorder %s23, 0
      %p44 = por %p42, %p43
      %p45 = scmp.ne.s32.totalorder %s31, %s32
      %p46 = scmp.eq.s32.totalorder %s24, 1
      %p47 = por %p45, %p46
      %p49 = scmp.ne.s32.totalorder %s32, %s48
      %p50 = scmp.eq.s32.totalorder %s24, 0
      %p51 = por %p49, %p50
      %s53 = sadd.s32 %s52, 1
      %p56 = scmp.eq.s32.totalorder %s18, 1
      %p57 = scmp.ne.s32.totalorder %s52, %s54
      %p58 = scmp.eq.s32.totalorder %s18, 0
      %p59 = por %p57, %p58
      %p60 = scmp.ne.s32.totalorder %s52, %s54
      %p61 = scmp.eq.s32.totalorder %s23, 1
      %p62 = por %p60, %p61
      %p63 = scmp.ne.s32.totalorder %s54, %s55
      %p64 = scmp.eq.s32.totalorder %s23, 0
      %p65 = por %p63, %p64
      %p66 = scmp.ne.s32.totalorder %s54, %s55
      %p67 = scmp.eq.s32.totalorder %s24, 1
      %p68 = por %p66, %p67
      %p70 = scmp.ne.s32.totalorder %s55, %s69
      %p71 = scmp.eq.s32.totalorder %s24, 0
      %p72 = por %p70, %p71
      %s74 = sadd.s32 %s73, 1
      %p77 = scmp.eq.s32.totalorder %s18, 1
      %p78 = scmp.ne.s32.totalorder %s73, %s75
      %p79 = scmp.eq.s32.totalorder %s18, 0
      %p80 = por %p78, %p79
      %p81 = scmp.ne.s32.totalorder %s73, %s75
      %p82 = scmp.eq.s32.totalorder %s23, 1
      %p83 = por %p81, %p82
      %p84 = scmp.ne.s32.totalorder %s75, %s76
      %p85 = scmp.eq.s32.totalorder %s23, 0
      %p86 = por %p84, %p85
      %p87 = scmp.ne.s32.totalorder %s75, %s76
      %p88 = scmp.eq.s32.totalorder %s24, 1
      %p89 = por %p87, %p88
      %p91 = scmp.ne.s32.totalorder %s76, %s90
      %p92 = scmp.eq.s32.totalorder %s24, 0
      %p93 = por %p91, %p92
      %s95 = sadd.s32 %s94, 1
      %p98 = scmp.eq.s32.totalorder %s18, 1
      %p99 = scmp.ne.s32.totalorder %s94, %s96
      %p100 = scmp.eq.s32.totalorder %s18, 0
      %p101 = por %p99, %p100
      %p102 = scmp.ne.s32.totalorder %s94, %s96
      %p103 = scmp.eq.s32.totalorder %s23, 1
      %p104 = por %p102, %p103
      %p105 = scmp.ne.s32.totalorder %s96, %s97
      %p106 = scmp.eq.s32.totalorder %s23, 0
      %p107 = por %p105, %p106
      %p108 = scmp.ne.s32.totalorder %s96, %s97
      %p109 = scmp.eq.s32.totalorder %s24, 1
      %p110 = por %p108, %p109
      %p112 = scmp.ne.s32.totalorder %s97, %s111
      %p113 = scmp.eq.s32.totalorder %s24, 0
      %p114 = por %p112, %p113
      %s116 = sadd.s32 %s115, 1
      %p119 = scmp.eq.s32.totalorder %s18, 1
      %p120 = scmp.ne.s32.totalorder %s115, %s117
      %p121 = scmp.eq.s32.totalorder %s18, 0
      %p122 = por %p120, %p121
      %p123 = scmp.ne.s32.totalorder %s115, %s117
      %p124 = scmp.eq.s32.totalorder %s23, 1
      %p125 = por %p123, %p124
      %p126 = scmp.ne.s32.totalorder %s117, %s118
      %p127 = scmp.eq.s32.totalorder %s23, 0
      %p128 = por %p126, %p127
      %p129 = scmp.ne.s32.totalorder %s117, %s118
      %p130 = scmp.eq.s32.totalorder %s24, 1
      %p131 = por %p129, %p130
      %p133 = scmp.ne.s32.totalorder %s118, %s132
      %p134 = scmp.eq.s32.totalorder %s24, 0
      %p135 = por %p133, %p134
      %s136 = ssub.s32 %s18, %s25
      %p137 = scmp.eq.s32.totalorder %s136, 0
      %s139 = sadd.s32 %s138, 1
      %s140 = scalar_select %p137, %s138, %s139
      %p143 = pneg %p137
      %p144 = scmp.eq.s32.totalorder %s18, 1
      %p145 = por %p143, %p144
      %p146 = scmp.ne.s32.totalorder %s138, %s141
      %p147 = scmp.eq.s32.totalorder %s18, 0
      %p148 = por %p146, %p147
      %p149 = scmp.ne.s32.totalorder %s138, %s141
      %p150 = scmp.eq.s32.totalorder %s23, 1
      %p151 = por %p149, %p150
      %p152 = scmp.ne.s32.totalorder %s141, %s142
      %p153 = scmp.eq.s32.totalorder %s23, 0
      %p154 = por %p152, %p153
      %p155 = scmp.ne.s32.totalorder %s141, %s142
      %p156 = scmp.eq.s32.totalorder %s24, 1
      %p157 = por %p155, %p156
      %p159 = scmp.ne.s32.totalorder %s142, %s158
      %p160 = scmp.eq.s32.totalorder %s24, 0
      %p161 = por %p159, %p160
      %p162 = scmp.le.s32.totalorder 1, %s18
      %p163 = scmp.lt.s32.totalorder %s18, 3
      %p164 = pnand %p162, %p163
      %p165 = pneg %p164
      // Predicated region
      $region9: #{ffn_pallas.1} parent=5 // pred_check
        _
      $region10: #{ffn_pallas.1} parent=5 // pred_check_branch
        %167 = sbr.rel (%p164) target = $region12
      $region11: #{ffn_pallas.1} parent=5 // pred_region
        %s168 = ssub.s32 %s18, 1
        // Predicated region
        $region13: #{ffn_pallas.1} parent=11 // pred_check
          %p169 = pneg %p65
        $region14: #{ffn_pallas.1} parent=11 // pred_check_branch
          %171 = sbr.rel (%p169) target = $region16
        $region15: #{ffn_pallas.1} parent=11 // pred_region
          %173 = vsyncadd [#allocation6], 0
          %s174 = sshll.u32 %s1, 4
          %s175 = int_to_ptr.hbm [resolvable:$true] %s174
          %s176 = sshll.u32 [#allocation5], 4
          %s177 = int_to_ptr.vmem [resolvable:$true] %s176
          %182 = dma.hbm_to_vmem [thread:$0]  %s175, 4096, %s177, [#allocation6], 256, 256, 16
        $region16: #{ffn_pallas.1} parent=11 // pred_fallthru
          _
        // Predicated region
        $region17: #{ffn_pallas.1} parent=11 // pred_check
          %p183 = pneg %p86
        $region18: #{ffn_pallas.1} parent=11 // pred_check_branch
          %185 = sbr.rel (%p183) target = $region20
        $region19: #{ffn_pallas.1} parent=11 // pred_region
          _
        $region20: #{ffn_pallas.1} parent=11 // pred_fallthru
          _
        // Predicated region
        $region21: #{ffn_pallas.1} parent=11 // pred_check
          %p186 = pneg %p107
        $region22: #{ffn_pallas.1} parent=11 // pred_check_branch
          %188 = sbr.rel (%p186) target = $region24
        $region23: #{ffn_pallas.1} parent=11 // pred_region
          %190 = vsyncadd [#allocation6], 0
          %s191 = sshll.u32 %s3, 4
          %s192 = int_to_ptr.hbm [resolvable:$true] %s191
          %s193 = sshll.u32 [#allocation7], 4
          %s194 = int_to_ptr.vmem [resolvable:$true] %s193
          %199 = dma.hbm_to_vmem [thread:$0]  %s192, 4096, %s194, [#allocation6], 128, 128, 8
        $region24: #{ffn_pallas.1} parent=11 // pred_fallthru
          _
        // Predicated region
        $region25: #{ffn_pallas.1} parent=11 // pred_check
          %p200 = pneg %p128
        $region26: #{ffn_pallas.1} parent=11 // pred_check_branch
          %202 = sbr.rel (%p200) target = $region28
        $region27: #{ffn_pallas.1} parent=11 // pred_region
          _
        $region28: #{ffn_pallas.1} parent=11 // pred_fallthru
          _
      $region12: #{ffn_pallas.1} parent=5 // pred_fallthru
        _
      %p203 = scmp.lt.s32.totalorder %s18, 2
      // Predicated region
      $region29: #{ffn_pallas.1} parent=5 // pred_check
        %p204 = pneg %p203
      $region30: #{ffn_pallas.1} parent=5 // pred_check_branch
        %206 = sbr.rel (%p204) target = $region32
      $region31: #{ffn_pallas.1} parent=5 // pred_region
        // Predicated region
        $region33: #{ffn_pallas.1} parent=31 // pred_check
          %p207 = pneg %p38
        $region34: #{ffn_pallas.1} parent=31 // pred_check_branch
          %209 = sbr.rel (%p207) target = $region36
        $region35: #{ffn_pallas.1} parent=31 // pred_region
          %s210 = sand.u32 %s28, 1
          %s211 = scalar_lea.sflag [#allocation3], %s210
          %s212 = sand.u32 %s28, 1
          %s213 = smul.addr %s212, 8
          %s214 = scalar_lea.vmem [#allocation2], %s213
          %216 = vsyncadd %s211, 0
          %s217 = smul.addr %s18, 8
          %s218 = scalar_lea.hbm %s0, %s217
          %s220 = sshll.u32 %s218, 4
          %s221 = int_to_ptr.hbm [resolvable:$true] %s220
          %s222 = sshll.u32 %s214, 4
          %s223 = int_to_ptr.vmem [resolvable:$true] %s222
          %225 = dma.hbm_to_vmem [thread:$0]  %s221, 128, %s223, %s211
        $region36: #{ffn_pallas.1} parent=31 // pred_fallthru
          _
      $region32: #{ffn_pallas.1} parent=5 // pred_fallthru
        _
      %p226 = scmp.le.s32.totalorder 1, %s18
      %p227 = scmp.lt.s32.totalorder %s18, 3
      %p228 = pnand %p226, %p227
      %p229 = pneg %p228
      // Predicated region
      $region37: #{ffn_pallas.1} parent=5 // pred_check
        _
      $region38: #{ffn_pallas.1} parent=5 // pred_check_branch
        %231 = sbr.rel (%p228) target = $region40
      $region39: #{ffn_pallas.1} parent=5 // pred_region
        %s232 = ssub.s32 %s18, 1
        %s233 = sand.u32 %s31, 1
        %s234 = scalar_lea.sflag [#allocation3], %s233
        %s235 = sand.u32 %s31, 1
        %s236 = smul.addr %s235, 8
        %s237 = scalar_lea.vmem [#allocation2], %s236
        // Predicated region
        $region41: #{ffn_pallas.1} parent=39 // pred_check
          %p238 = pneg %p44
        $region42: #{ffn_pallas.1} parent=39 // pred_check_branch
          %240 = sbr.rel (%p238) target = $region44
        $region43: #{ffn_pallas.1} parent=39 // pred_region
          %242 = dma.done %s234, 128
        $region44: #{ffn_pallas.1} parent=39 // pred_fallthru
          _
        // Predicated region
        $region45: #{ffn_pallas.1} parent=39 // pred_check
          %p243 = pneg %p65
        $region46: #{ffn_pallas.1} parent=39 // pred_check_branch
          %245 = sbr.rel (%p243) target = $region48
        $region47: #{ffn_pallas.1} parent=39 // pred_region
          %247 = dma.done [#allocation6], 4096
        $region48: #{ffn_pallas.1} parent=39 // pred_fallthru
          _
        // Predicated region
        $region49: #{ffn_pallas.1} parent=39 // pred_check
          %p248 = pneg %p107
        $region50: #{ffn_pallas.1} parent=39 // pred_check_branch
          %250 = sbr.rel (%p248) target = $region52
        $region51: #{ffn_pallas.1} parent=39 // pred_region
          %252 = dma.done [#allocation6], 4096
        $region52: #{ffn_pallas.1} parent=39 // pred_fallthru
          _
        %s253 = sand.u32 %s31, 1
        %s254 = scalar_lea.sflag [#allocation3], %s253
        %s255 = sand.u32 %s31, 1
        %s256 = smul.addr %s255, 8
        %s257 = scalar_lea.vmem [#allocation2], %s256
        %p258 = pneg %p44
        %p259 = pneg %p41
        %p260 = pneg %p65
        %p261 = pneg %p62
        %p262 = pneg %p86
        %p263 = pneg %p83
        %p264 = pneg %p107
        %p265 = pneg %p104
        %p266 = pneg %p128
        %p267 = pneg %p125
        %p268 = pneg %p154
        %p269 = pneg %p151
        %s270 = sand.u32 %s141, 1
        %s271 = scalar_lea.sflag [#allocation4], %s270
        %s272 = sand.u32 %s141, 1
        %s273 = smul.addr %s272, 8
        %s274 = scalar_lea.vmem [#allocation8], %s273
        %v275 = vld [vmem:[%s237] sm:$0xff]
        %v276 = vld [vmem:[#allocation5] sm:$0xff]
        %v277 = vld [vmem:[#allocation5 + $0x8] sm:$0xff]
        %v278 = vld [vmem:[#allocation5 + $0x10] sm:$0xff]
        %v279 = vld [vmem:[#allocation5 + $0x18] sm:$0xff]
        %v280 = vld [vmem:[#allocation5 + $0x20] sm:$0xff]
        %v281 = vld [vmem:[#allocation5 + $0x28] sm:$0xff]
        %v282 = vld [vmem:[#allocation5 + $0x30] sm:$0xff]
        %v283 = vld [vmem:[#allocation5 + $0x38] sm:$0xff]
        %v284 = vld [vmem:[#allocation5 + $0x40] sm:$0xff]
        %v285 = vld [vmem:[#allocation5 + $0x48] sm:$0xff]
        %v286 = vld [vmem:[#allocation5 + $0x50] sm:$0xff]
        %v287 = vld [vmem:[#allocation5 + $0x58] sm:$0xff]
        %v288 = vld [vmem:[#allocation5 + $0x60] sm:$0xff]
        %v289 = vld [vmem:[#allocation5 + $0x68] sm:$0xff]
        %v290 = vld [vmem:[#allocation5 + $0x70] sm:$0xff]
        %v291 = vld [vmem:[#allocation5 + $0x78] sm:$0xff]
        %v292 = vld [vmem:[#allocation5 + $0x80] sm:$0xff]
        %v293 = vld [vmem:[#allocation5 + $0x88] sm:$0xff]
        %v294 = vld [vmem:[#allocation5 + $0x90] sm:$0xff]
        %v295 = vld [vmem:[#allocation5 + $0x98] sm:$0xff]
        %v296 = vld [vmem:[#allocation5 + $0xa0] sm:$0xff]
        %v297 = vld [vmem:[#allocation5 + $0xa8] sm:$0xff]
        %v298 = vld [vmem:[#allocation5 + $0xb0] sm:$0xff]
        %v299 = vld [vmem:[#allocation5 + $0xb8] sm:$0xff]
        %v300 = vld [vmem:[#allocation5 + $0xc0] sm:$0xff]
        %v301 = vld [vmem:[#allocation5 + $0xc8] sm:$0xff]
        %v302 = vld [vmem:[#allocation5 + $0xd0] sm:$0xff]
        %v303 = vld [vmem:[#allocation5 + $0xd8] sm:$0xff]
        %v304 = vld [vmem:[#allocation5 + $0xe0] sm:$0xff]
        %v305 = vld [vmem:[#allocation5 + $0xe8] sm:$0xff]
        %v306 = vld [vmem:[#allocation5 + $0xf0] sm:$0xff]
        %v307 = vld [vmem:[#allocation5 + $0xf8] sm:$0xff]
        %v308 = vld [vmem:[%s2] sm:$0x3]
        %v310 = vperm.slane %v308, 0
        %v311 = vperm.slane %v308, 1
        %314 = vmatpush.msra.mxu0 %v306
        %315 = vmatpush.msra.mxu0 %v304
        %316 = vmatpush.msra.mxu0 %v302
        %317 = vmatpush.msra.mxu0 %v300
        %318 = vmatpush.msra.mxu0 %v298
        %319 = vmatpush.msra.mxu0 %v296
        %320 = vmatpush.msra.mxu0 %v294
        %321 = vmatpush.msra.mxu0 %v292
        %322 = vmatpush.msra.mxu0 %v290
        %323 = vmatpush.msra.mxu0 %v288
        %324 = vmatpush.msra.mxu0 %v286
        %325 = vmatpush.msra.mxu0 %v284
        %326 = vmatpush.msra.mxu0 %v282
        %327 = vmatpush.msra.mxu0 %v280
        %328 = vmatpush.msra.mxu0 %v278
        %329 = vmatpush.msra.mxu0 %v276
        %330 = vmatmul.f32.gmra.mxu0 %v275
        %v331 = vpop.f32.mrf.mxu0
        %v332 = vadd.f32 %v310, %v331
        %333 = vdwg.mxu0
        %334 = vmatpush.msra.mxu0 %v307
        %335 = vmatpush.msra.mxu0 %v305
        %336 = vmatpush.msra.mxu0 %v303
        %337 = vmatpush.msra.mxu0 %v301
        %338 = vmatpush.msra.mxu0 %v299
        %339 = vmatpush.msra.mxu0 %v297
        %340 = vmatpush.msra.mxu0 %v295
        %341 = vmatpush.msra.mxu0 %v293
        %342 = vmatpush.msra.mxu0 %v291
        %343 = vmatpush.msra.mxu0 %v289
        %344 = vmatpush.msra.mxu0 %v287
        %345 = vmatpush.msra.mxu0 %v285
        %346 = vmatpush.msra.mxu0 %v283
        %347 = vmatpush.msra.mxu0 %v281
        %348 = vmatpush.msra.mxu0 %v279
        %349 = vmatpush.msra.mxu0 %v277
        %350 = vmatmul.f32.gmra.mxu0 %v275
        %v351 = vpop.f32.mrf.mxu0
        %v352 = vadd.f32 %v311, %v351
        %353 = vdwg.mxu0
        %v354 = vmul.f32 %v332, 0.5
        %v355 = vmul.f32 %v352, 0.5
        %v356 = vmul.f32 %v332, 0.70710677
        %v357 = vmul.f32 %v352, 0.70710677
        %v358 = vmul.f32 %v356, %v356
        %v359 = vmin.f32 16.0, %v358
        %v360 = vmul.f32 %v359, 2.1237322e-06
        %v361 = vadd.f32 %v360, 0.00028619796
        %v362 = vmul.f32 %v359, %v361
        %v363 = vadd.f32 %v362, 0.0036580483
        %v364 = vmul.f32 %v359, %v363
        %v365 = vadd.f32 %v364, 0.05243302
        %v366 = vmul.f32 %v359, %v365
        %v367 = vadd.f32 %v366, 0.18741608
        %v368 = vmul.f32 %v359, %v367
        %v369 = vadd.f32 %v368, 1.1283791
        %v370 = vmul.f32 %v356, %v369
        %v371 = vmul.f32 %v359, 3.8918573e-05
        %v372 = vadd.f32 %v371, 0.001143296
        %v373 = vmul.f32 %v359, %v372
        %v374 = vadd.f32 %v373, 0.014752088
        %v375 = vmul.f32 %v359, %v374
        %v376 = vadd.f32 %v375, 0.112945676
        %v377 = vmul.f32 %v359, %v376
        %v378 = vadd.f32 %v377, 0.4994258
        %v379 = vmul.f32 %v359, %v378
        %v380 = vadd.f32 %v379, 1.0
        %v381 = vrcp.pop %v380
        %v382 = vmul.f32 %v380, %v381
        %v383 = vsub.f32 1.0, %v382
        %v384 = vmul.f32 %v381, %v383
        %v385 = vadd.f32 %v381, %v384
        %vm386 = vweird.f32 %v380
        %vm387 = vweird.f32 %v381
        %vm388 = vmor %vm386, %vm387
        %v389 = vsel %vm388, %v381, %v385
        %v390 = vand.u32 2147483647, %v380
        %vm391 = vcmp.eq.f32.partialorder %v390, 8.507059e+37
        %v392 = vand.u32 %v380, 2147483648
        %v393 = vor.u32 1.1754944e-38, %v392
        %v394 = vsel %vm391, %v393, %v389
        %v395 = vmul.f32 %v370, %v394
        %v396 = vmin.f32 %v395, 1.0
        %v397 = vmax.f32 %v396, -1.0
        %v398 = vmul.f32 %v357, %v357
        %v399 = vmin.f32 16.0, %v398
        %v400 = vmul.f32 %v399, 2.1237322e-06
        %v401 = vadd.f32 %v400, 0.00028619796
        %v402 = vmul.f32 %v399, %v401
        %v403 = vadd.f32 %v402, 0.0036580483
        %v404 = vmul.f32 %v399, %v403
        %v405 = vadd.f32 %v404, 0.05243302
        %v406 = vmul.f32 %v399, %v405
        %v407 = vadd.f32 %v406, 0.18741608
        %v408 = vmul.f32 %v399, %v407
        %v409 = vadd.f32 %v408, 1.1283791
        %v410 = vmul.f32 %v357, %v409
        %v411 = vmul.f32 %v399, 3.8918573e-05
        %v412 = vadd.f32 %v411, 0.001143296
        %v413 = vmul.f32 %v399, %v412
        %v414 = vadd.f32 %v413, 0.014752088
        %v415 = vmul.f32 %v399, %v414
        %v416 = vadd.f32 %v415, 0.112945676
        %v417 = vmul.f32 %v399, %v416
        %v418 = vadd.f32 %v417, 0.4994258
        %v419 = vmul.f32 %v399, %v418
        %v420 = vadd.f32 %v419, 1.0
        %v421 = vrcp.pop %v420
        %v422 = vmul.f32 %v420, %v421
        %v423 = vsub.f32 1.0, %v422
        %v424 = vmul.f32 %v421, %v423
        %v425 = vadd.f32 %v421, %v424
        %vm426 = vweird.f32 %v420
        %vm427 = vweird.f32 %v421
        %vm428 = vmor %vm426, %vm427
        %v429 = vsel %vm428, %v421, %v425
        %v430 = vand.u32 2147483647, %v420
        %vm431 = vcmp.eq.f32.partialorder %v430, 8.507059e+37
        %v432 = vand.u32 %v420, 2147483648
        %v433 = vor.u32 1.1754944e-38, %v432
        %v434 = vsel %vm431, %v433, %v429
        %v435 = vmul.f32 %v410, %v434
        %v436 = vmin.f32 %v435, 1.0
        %v437 = vmax.f32 %v436, -1.0
        %v438 = vadd.f32 %v397, 1.0
        %v439 = vadd.f32 %v437, 1.0
        %v440 = vmul.f32 %v354, %v438
        %v441 = vmul.f32 %v355, %v439
        %v442 = vld [vmem:[#allocation7] sm:$0xff]
        %v443 = vld [vmem:[#allocation7 + $0x8] sm:$0xff]
        %v444 = vld [vmem:[#allocation7 + $0x10] sm:$0xff]
        %v445 = vld [vmem:[#allocation7 + $0x18] sm:$0xff]
        %v446 = vld [vmem:[#allocation7 + $0x20] sm:$0xff]
        %v447 = vld [vmem:[#allocation7 + $0x28] sm:$0xff]
        %v448 = vld [vmem:[#allocation7 + $0x30] sm:$0xff]
        %v449 = vld [vmem:[#allocation7 + $0x38] sm:$0xff]
        %v450 = vld [vmem:[#allocation7 + $0x40] sm:$0xff]
        %v451 = vld [vmem:[#allocation7 + $0x48] sm:$0xff]
        %v452 = vld [vmem:[#allocation7 + $0x50] sm:$0xff]
        %v453 = vld [vmem:[#allocation7 + $0x58] sm:$0xff]
        %v454 = vld [vmem:[#allocation7 + $0x60] sm:$0xff]
        %v455 = vld [vmem:[#allocation7 + $0x68] sm:$0xff]
        %v456 = vld [vmem:[#allocation7 + $0x70] sm:$0xff]
        %v457 = vld [vmem:[#allocation7 + $0x78] sm:$0xff]
        %v458 = vld [vmem:[#allocation7 + $0x80] sm:$0xff]
        %v459 = vld [vmem:[#allocation7 + $0x88] sm:$0xff]
        %v460 = vld [vmem:[#allocation7 + $0x90] sm:$0xff]
        %v461 = vld [vmem:[#allocation7 + $0x98] sm:$0xff]
        %v462 = vld [vmem:[#allocation7 + $0xa0] sm:$0xff]
        %v463 = vld [vmem:[#allocation7 + $0xa8] sm:$0xff]
        %v464 = vld [vmem:[#allocation7 + $0xb0] sm:$0xff]
        %v465 = vld [vmem:[#allocation7 + $0xb8] sm:$0xff]
        %v466 = vld [vmem:[#allocation7 + $0xc0] sm:$0xff]
        %v467 = vld [vmem:[#allocation7 + $0xc8] sm:$0xff]
        %v468 = vld [vmem:[#allocation7 + $0xd0] sm:$0xff]
        %v469 = vld [vmem:[#allocation7 + $0xd8] sm:$0xff]
        %v470 = vld [vmem:[#allocation7 + $0xe0] sm:$0xff]
        %v471 = vld [vmem:[#allocation7 + $0xe8] sm:$0xff]
        %v472 = vld [vmem:[#allocation7 + $0xf0] sm:$0xff]
        %v473 = vld [vmem:[#allocation7 + $0xf8] sm:$0xff]
        %v474 = vld [vmem:[%s4] sm:$0x1]
        %v476 = vperm.slane %v474, 0
        %478 = vmatpush.msra.mxu0 %v457
        %479 = vmatpush.msra.mxu0 %v456
        %480 = vmatpush.msra.mxu0 %v455
        %481 = vmatpush.msra.mxu0 %v454
        %482 = vmatpush.msra.mxu0 %v453
        %483 = vmatpush.msra.mxu0 %v452
        %484 = vmatpush.msra.mxu0 %v451
        %485 = vmatpush.msra.mxu0 %v450
        %486 = vmatpush.msra.mxu0 %v449
        %487 = vmatpush.msra.mxu0 %v448
        %488 = vmatpush.msra.mxu0 %v447
        %489 = vmatpush.msra.mxu0 %v446
        %490 = vmatpush.msra.mxu0 %v445
        %491 = vmatpush.msra.mxu0 %v444
        %492 = vmatpush.msra.mxu0 %v443
        %493 = vmatpush.msra.mxu0 %v442
        %494 = vmatmul.f32.gmra.mxu0 %v440
        %v495 = vpop.f32.mrf.mxu0
        %v496 = vadd.f32 %v476, %v495
        %497 = vdwg.mxu0
        %498 = vmatpush.msra.mxu0 %v473
        %499 = vmatpush.msra.mxu0 %v472
        %500 = vmatpush.msra.mxu0 %v471
        %501 = vmatpush.msra.mxu0 %v470
        %502 = vmatpush.msra.mxu0 %v469
        %503 = vmatpush.msra.mxu0 %v468
        %504 = vmatpush.msra.mxu0 %v467
        %505 = vmatpush.msra.mxu0 %v466
        %506 = vmatpush.msra.mxu0 %v465
        %507 = vmatpush.msra.mxu0 %v464
        %508 = vmatpush.msra.mxu0 %v463
        %509 = vmatpush.msra.mxu0 %v462
        %510 = vmatpush.msra.mxu0 %v461
        %511 = vmatpush.msra.mxu0 %v460
        %512 = vmatpush.msra.mxu0 %v459
        %513 = vmatpush.msra.mxu0 %v458
        %514 = vmatmul.f32.gmra.mxu0 %v441
        %v515 = vpop.f32.mrf.mxu0
        %v516 = vadd.f32 %v496, %v515
        %517 = vdwg.mxu0
        %518 = vst [vmem:[%s274] sm:$0xff] %v516
        %s519 = sand.u32 %s141, 1
        %s520 = scalar_lea.sflag [#allocation4], %s519
        %s521 = sand.u32 %s141, 1
        %s522 = smul.addr %s521, 8
        %s523 = scalar_lea.vmem [#allocation8], %s522
        // Predicated region
        $region53: #{ffn_pallas.1} parent=39 // pred_check
          %p524 = pneg %p151
        $region54: #{ffn_pallas.1} parent=39 // pred_check_branch
          %526 = sbr.rel (%p524) target = $region56
        $region55: #{ffn_pallas.1} parent=39 // pred_region
          %528 = vsyncadd %s520, 0
          %s529 = smul.addr %s23, 8
          %s530 = scalar_lea.hbm %s5, %s529
          %s532 = sshll.u32 %s523, 4
          %s533 = int_to_ptr.vmem [resolvable:$true] %s532
          %s534 = sshll.u32 %s530, 4
          %s535 = int_to_ptr.hbm [resolvable:$true] %s534
          %537 = dma.vmem_to_hbm [thread:$0]  %s533, 128, %s535, %s520
        $region56: #{ffn_pallas.1} parent=39 // pred_fallthru
          _
      $region40: #{ffn_pallas.1} parent=5 // pred_fallthru
        _
      %p538 = scmp.le.s32.totalorder 2, %s18
      // Predicated region
      $region57: #{ffn_pallas.1} parent=5 // pred_check
        %p539 = pneg %p538
      $region58: #{ffn_pallas.1} parent=5 // pred_check_branch
        %541 = sbr.rel (%p539) target = $region60
      $region59: #{ffn_pallas.1} parent=5 // pred_region
        %s542 = ssub.s32 %s18, 2
        // Predicated region
        $region61: #{ffn_pallas.1} parent=59 // pred_check
          %p543 = pneg %p157
        $region62: #{ffn_pallas.1} parent=59 // pred_check_branch
          %545 = sbr.rel (%p543) target = $region64
        $region63: #{ffn_pallas.1} parent=59 // pred_region
          %s546 = sand.u32 %s142, 1
          %s547 = scalar_lea.sflag [#allocation4], %s546
          %s548 = sand.u32 %s142, 1
          %s549 = smul.addr %s548, 8
          %s550 = scalar_lea.vmem [#allocation8], %s549
          %552 = dma.done %s547, 128
        $region64: #{ffn_pallas.1} parent=59 // pred_fallthru
          _
      $region60: #{ffn_pallas.1} parent=5 // pred_fallthru
        _
    $region6: #{ffn_pallas.1} parent=1 // loop_footer
      %s22 = sadd.s32 1, %s18
    $region7: #{ffn_pallas.1} parent=1 // loop_footer_branch
      %17 = sbr.rel target = $region3
    $region8: #{ffn_pallas.1} parent=1 // loop_exit
      _
    %553 = vsyncpa [#allocation3], 1
    %s554 = scalar_lea.sflag [#allocation3], 1
    %555 = vsyncpa %s554, 1
    %556 = vsyncpa [#allocation6], 1
    %557 = vsyncpa [#allocation4], 1
    %s558 = scalar_lea.sflag [#allocation4], 1
    %559 = vsyncpa %s558, 1

</llo_original>
